<compile_context>
chip_gen: v5e
topology: v5e:2x2
jax: 0.10.0
libtpu: 0.0.40
codegen_flags: <defaults>
</compile_context>

<pallas_src>
import functools

import jax
import jax.numpy as jnp
from jax.experimental import pallas as pl
from jax.experimental.pallas import tpu as pltpu


_VMEM_LIMIT = 32 * 1024 * 1024   # fits default scoped VMEM on v5e/v6e/v7x
# Tile caps kept v7x-safe (64 MiB physical VMEM); could be raised on v5e/v6e.
_TM_CAP = 512   # GEMM row tile (multiple of 8)
_TN_CAP = 512   # GEMM output-column tile (multiple of 128)


# ----------------------------- matmul (+ fused act) -------------------------

def _matmul_kernel(activation, a_ref, b_ref, o_ref):
    acc = jnp.dot(a_ref[...], b_ref[...], preferred_element_type=jnp.float32)
    if activation == "sigmoid":
        acc = jax.nn.sigmoid(acc)      # EUP; essentially free in the epilogue
    o_ref[...] = acc


def matmul_pallas(a, b, activation="none", tm_cap=_TM_CAP, tn_cap=_TN_CAP):
    """(M, K) @ (K, Nc) -> (M, Nc) f32, bf16 operands + f32 MXU accumulation.

    cdiv grid over rows and output columns (both 'parallel').  K is kept whole
    (<= 4*Cin), so partial edge blocks only pad M/Nc; padded output rows/cols
    are dropped on store.
    """
    M, K = a.shape
    K2, Nc = b.shape
    assert K == K2
    tm = M if M <= tm_cap else tm_cap     # cap is a multiple of 8
    tn = Nc if Nc <= tn_cap else tn_cap   # cap is a multiple of 128
    grid = (pl.cdiv(M, tm), pl.cdiv(Nc, tn))
    return pl.pallas_call(
        functools.partial(_matmul_kernel, activation),
        out_shape=jax.ShapeDtypeStruct((M, Nc), jnp.float32),
        grid=grid,
        in_specs=[
            pl.BlockSpec((tm, K), lambda i, j: (i, 0)),
            pl.BlockSpec((K, tn), lambda i, j: (0, j)),
        ],
        out_specs=pl.BlockSpec((tm, tn), lambda i, j: (i, j)),
        compiler_params=pltpu.CompilerParams(
            dimension_semantics=("parallel", "parallel"),
            vmem_limit_bytes=_VMEM_LIMIT),
    )(a.astype(jnp.bfloat16), b.astype(jnp.bfloat16))


# --------------------------- BatchNorm + ReLU (tiled) ------------------------

def _bn_stats_kernel(valid_rows, x_ref, sum_ref, ssq_ref):
    i = pl.program_id(0)
    tm = x_ref.shape[0]
    row = i * tm + jax.lax.broadcasted_iota(jnp.int32, x_ref.shape, 0)
    x = jnp.where(row < valid_rows, x_ref[...], 0.0)   # mask padded edge rows

    @pl.when(i == 0)
    def _():
        sum_ref[...] = jnp.zeros_like(sum_ref)
        ssq_ref[...] = jnp.zeros_like(ssq_ref)

    sum_ref[...] += jnp.sum(x, axis=0, keepdims=True)
    ssq_ref[...] += jnp.sum(x * x, axis=0, keepdims=True)


def _bn_apply_relu_kernel(x_ref, scale_ref, shift_ref, o_ref):
    o_ref[...] = jnp.maximum(x_ref[...] * scale_ref[...] + shift_ref[...], 0.0)


def bn_relu_pallas(x, gamma, beta, eps=1e-5, tm_cap=512):
    """x: (M, C) with M = N*H*W.  Training-mode BatchNorm2d (biased batch
    statistics) + ReLU, as two tiled Pallas passes.

    For C < 128 the slab is folded to a lane-dense (M/F, F*C = 128) layout so
    both passes use full-width (unmasked) vector loads/stores; the F partial
    per-channel sums are folded in the tiny f32 finalize between the passes.
    """
    M, C = x.shape
    x = x.astype(jnp.float32)
    if C < 128 and 128 % C == 0 and M % (128 // C) == 0:
        F = 128 // C
    else:
        F = 1
    Mf, Cf = M // F, C * F
    xf = x.reshape(Mf, Cf)
    tm = Mf if Mf <= tm_cap else tm_cap
    grid = (pl.cdiv(Mf, tm),)

    s, ss = pl.pallas_call(
        functools.partial(_bn_stats_kernel, Mf),
        out_shape=(jax.ShapeDtypeStruct((1, Cf), jnp.float32),
                   jax.ShapeDtypeStruct((1, Cf), jnp.float32)),
        grid=grid,
        in_specs=[pl.BlockSpec((tm, Cf), lambda i: (i, 0))],
        out_specs=(pl.BlockSpec((1, Cf), lambda i: (0, 0)),
                   pl.BlockSpec((1, Cf), lambda i: (0, 0))),
        compiler_params=pltpu.CompilerParams(
            dimension_semantics=("arbitrary",),        # resident accumulators
            vmem_limit_bytes=_VMEM_LIMIT),
    )(xf)

    # tiny per-channel finalize (plain JAX, fused under jit)
    s = s.reshape(F, C).sum(axis=0)
    ss = ss.reshape(F, C).sum(axis=0)
    mean = s / M
    var = ss / M - mean * mean                         # biased (training mode)
    scale = gamma.astype(jnp.float32) * jax.lax.rsqrt(var + eps)
    shift = beta.astype(jnp.float32) - mean * scale
    scale_f = jnp.tile(scale, (F,)).reshape(1, Cf)
    shift_f = jnp.tile(shift, (F,)).reshape(1, Cf)

    out = pl.pallas_call(
        _bn_apply_relu_kernel,
        out_shape=jax.ShapeDtypeStruct((Mf, Cf), jnp.float32),
        grid=grid,
        in_specs=[pl.BlockSpec((tm, Cf), lambda i: (i, 0)),
                  pl.BlockSpec((1, Cf), lambda i: (0, 0)),
                  pl.BlockSpec((1, Cf), lambda i: (0, 0))],
        out_specs=pl.BlockSpec((tm, Cf), lambda i: (i, 0)),
        compiler_params=pltpu.CompilerParams(
            dimension_semantics=("parallel",),
            vmem_limit_bytes=_VMEM_LIMIT),
    )(xf, scale_f, shift_f)
    return out.reshape(M, C)


# -------- ConvTranspose2d(k=4, s=2, p=1) via sub-pixel phase decomposition ---
#
# out[n, 2p - ph, 2q - pw, co] =
#     sum_{dh,dw,ci} xpad[n, p+dh, q+dw, ci] * W[ci, co, 3-ph-2*dh, 3-pw-2*dw]
# (xpad = x zero-padded by 1; derived directly from oh = 2*ih - 1 + kh.)

def convT_s2_weight_to_mat(W):
    """PyTorch ConvTranspose2d weight (Cin, Cout, 4, 4) -> phase-GEMM matrix
    (4*Cin, 4*Cout): rows ordered (dh, dw, ci), cols ordered (ph, pw, co)."""
    Cin, Cout, KH, KW = W.shape
    assert KH == 4 and KW == 4
    Wt = jnp.transpose(W, (2, 3, 0, 1))                 # (kh, kw, ci, co)
    kmap = jnp.array([[3, 2], [1, 0]], jnp.int32)       # kmap[d, phase] = 3-phase-2d
    # B6[dh, ph, dw, pw, ci, co] = W[ci, co, 3-ph-2dh, 3-pw-2dw]
    B6 = Wt[kmap[:, :, None, None], kmap[None, None, :, :]]
    return jnp.transpose(B6, (0, 2, 4, 1, 3, 5)).reshape(4 * Cin, 4 * Cout)


def _phase_patches(x):
    """x: (N, H, W, C) -> A: (N*(H+1)*(W+1), 4*C), columns ordered (dh, dw, ci)."""
    N, H, W, C = x.shape
    xp = jnp.pad(x, ((0, 0), (1, 1), (1, 1), (0, 0)))
    slabs = [xp[:, dh:dh + H + 1, dw:dw + W + 1, :]
             for dh in (0, 1) for dw in (0, 1)]
    patches = jnp.stack(slabs, axis=3)                  # (N, H+1, W+1, 4, C)
    return patches.reshape(N * (H + 1) * (W + 1), 4 * C)


def _interleave_phases(y, N, H, W):
    """y: (N*(H+1)*(W+1), 4*Cout) GEMM output -> (N, 2H, 2W, Cout)."""
    Cout = y.shape[1] // 4
    Y = y.reshape(N, H + 1, W + 1, 2, 2, Cout)          # (n, p, q, ph, pw, co)
    ee = Y[:, 0:H,     0:W,     0, 0, :]                # out[2h,   2w  ]
    eo = Y[:, 0:H,     1:W + 1, 0, 1, :]                # out[2h,   2w+1]
    oe = Y[:, 1:H + 1, 0:W,     1, 0, :]                # out[2h+1, 2w  ]
    oo = Y[:, 1:H + 1, 1:W + 1, 1, 1, :]                # out[2h+1, 2w+1]
    blk = jnp.stack([jnp.stack([ee, eo], axis=3),
                     jnp.stack([oe, oo], axis=3)], axis=3)   # (n,h,w,rh,rw,co)
    return jnp.transpose(blk, (0, 1, 3, 2, 4, 5)).reshape(N, 2 * H, 2 * W, Cout)


def conv_transpose_s2_pallas(x_nhwc, wmat, activation="none"):
    """ConvTranspose2d(k=4, s=2, p=1, bias=False) on NHWC input, with an
    optional activation fused into the GEMM epilogue."""
    N, H, W, _ = x_nhwc.shape
    A = _phase_patches(x_nhwc)
    y = matmul_pallas(A, wmat, activation=activation)
    return _interleave_phases(y, N, H, W)


# ------------------------------ DCGAN forward -------------------------------

def init_dcgan_params(key, z_dim=32, image_channels=1, hidden_dim=16,
                      w_scale=0.02):
    f = hidden_dim
    ks = jax.random.split(key, 5)
    w = lambda k, s: (w_scale * jax.random.normal(k, s)).astype(jnp.float32)
    return {
        "W1": w(ks[0], (z_dim, f * 8, 4, 4)),
        "W2": w(ks[1], (f * 8, f * 4, 4, 4)),
        "W3": w(ks[2], (f * 4, f * 2, 4, 4)),
        "W4": w(ks[3], (f * 2, f, 4, 4)),
        "W5": w(ks[4], (f, image_channels, 4, 4)),
        "g1": jnp.ones((f * 8,), jnp.float32), "b1": jnp.zeros((f * 8,), jnp.float32),
        "g2": jnp.ones((f * 4,), jnp.float32), "b2": jnp.zeros((f * 4,), jnp.float32),
        "g3": jnp.ones((f * 2,), jnp.float32), "b3": jnp.zeros((f * 2,), jnp.float32),
        "g4": jnp.ones((f,), jnp.float32),     "b4": jnp.zeros((f,), jnp.float32),
    }


def prepare_weights(params):
    """Hoisted one-time weight preprocessing: bf16 GEMM matrices."""
    W1 = params["W1"]
    Z, C1 = W1.shape[0], W1.shape[1]
    # layer1 acts on a 1x1 map (s=1, p=0): plain matmul, cols ordered (kh, kw, co)
    w1 = jnp.transpose(W1, (0, 2, 3, 1)).reshape(Z, 16 * C1)
    prep = {
        "w1": w1.astype(jnp.bfloat16),
        "w2": convT_s2_weight_to_mat(params["W2"]).astype(jnp.bfloat16),
        "w3": convT_s2_weight_to_mat(params["W3"]).astype(jnp.bfloat16),
        "w4": convT_s2_weight_to_mat(params["W4"]).astype(jnp.bfloat16),
        "w5": convT_s2_weight_to_mat(params["W5"]).astype(jnp.bfloat16),
    }
    for k in ("g1", "b1", "g2", "b2", "g3", "b3", "g4", "b4"):
        prep[k] = params[k].astype(jnp.float32)
    return prep


def dcgan_forward(prep, z):
    """DCGAN.forward(x) == Generator(x).  z: (N, z_dim) -> (N, C, 64, 64) NCHW."""
    N = z.shape[0]

    # layer1: ConvTranspose2d(z, 8f, k=4, s=1, p=0) on a 1x1 map == matmul.
    C1 = prep["w1"].shape[1] // 16
    y1 = matmul_pallas(z, prep["w1"])                          # (N, 16*C1)
    x = bn_relu_pallas(y1.reshape(N * 16, C1), prep["g1"], prep["b1"])
    x = x.reshape(N, 4, 4, C1)                                 # NHWC

    # layers 2-4: ConvT(k=4, s=2, p=1) + BN + ReLU
    for wk, gk, bk in (("w2", "g2", "b2"), ("w3", "g3", "b3"), ("w4", "g4", "b4")):
        x = conv_transpose_s2_pallas(x, prep[wk])
        Nb, Ho, Wo, Co = x.shape
        x = bn_relu_pallas(x.reshape(Nb * Ho * Wo, Co), prep[gk], prep[bk])
        x = x.reshape(Nb, Ho, Wo, Co)

    # layer5: ConvT(k=4, s=2, p=1) + Sigmoid fused into the GEMM epilogue.
    x = conv_transpose_s2_pallas(x, prep["w5"], activation="sigmoid")
    return jnp.transpose(x, (0, 3, 1, 2))                      # back to NCHW


# ----------------------- pure-JAX references & self-checks -------------------

def _convT_ref(x_nchw, W, stride, pad):
    """PyTorch ConvTranspose2d(bias=False) reference via lax.conv_general_dilated."""
    k = W.shape[2]
    Wflip = jnp.transpose(W[:, :, ::-1, ::-1], (1, 0, 2, 3))   # (Cout, Cin, kh, kw)
    return jax.lax.conv_general_dilated(
        x_nchw, Wflip, window_strides=(1, 1),
        padding=[(k - 1 - pad, k - 1 - pad)] * 2,
        lhs_dilation=(stride, stride),
        dimension_numbers=("NCHW", "OIHW", "NCHW"),
        precision=jax.lax.Precision.HIGHEST)


def _reference_forward(params, z, eps=1e-5):
    """Pure-JAX f32 reference with the same PyTorch semantics."""
    def bn_relu(x, g, b):
        mean = x.mean(axis=(0, 2, 3), keepdims=True)
        var = ((x - mean) ** 2).mean(axis=(0, 2, 3), keepdims=True)
        y = (x - mean) * jax.lax.rsqrt(var + eps) * g[None, :, None, None] \
            + b[None, :, None, None]
        return jnp.maximum(y, 0.0)

    x = z[:, :, None, None]
    x = bn_relu(_convT_ref(x, params["W1"], 1, 0), params["g1"], params["b1"])
    x = bn_relu(_convT_ref(x, params["W2"], 2, 1), params["g2"], params["b2"])
    x = bn_relu(_convT_ref(x, params["W3"], 2, 1), params["g3"], params["b3"])
    x = bn_relu(_convT_ref(x, params["W4"], 2, 1), params["g4"], params["b4"])
    return jax.nn.sigmoid(_convT_ref(x, params["W5"], 2, 1))


def _selfcheck_convT():
    """Phase-GEMM ConvTranspose2d(4,2,1) vs lax reference (unit-scale weights)."""
    k1, k2 = jax.random.split(jax.random.PRNGKey(1))
    N, H, W, Cin, Cout = 2, 5, 6, 16, 8
    x = jax.random.normal(k1, (N, Cin, H, W), jnp.float32)
    w = jax.random.normal(k2, (Cin, Cout, 4, 4), jnp.float32)
    ref = _convT_ref(x, w, stride=2, pad=1)
    got = conv_transpose_s2_pallas(
        jnp.transpose(x, (0, 2, 3, 1)),
        convT_s2_weight_to_mat(w).astype(jnp.bfloat16))
    got = jnp.transpose(got, (0, 3, 1, 2))
    err = float(jnp.max(jnp.abs(got - ref)))
    tol = 0.03 * float(jnp.max(jnp.abs(ref)) + 1e-6)
    assert err < tol, f"convT mismatch: {err} vs tol {tol}"


def _selfcheck_bn():
    """Tiled, lane-folded BN+ReLU vs plain-JAX reference."""
    M, C = 48, 16
    x = jax.random.normal(jax.random.PRNGKey(2), (M, C), jnp.float32) * 3.0 + 1.5
    g = jnp.linspace(0.5, 1.5, C).astype(jnp.float32)
    b = jnp.linspace(-1.0, 1.0, C).astype(jnp.float32)
    got = bn_relu_pallas(x, g, b)
    mean = x.mean(axis=0)
    var = ((x - mean) ** 2).mean(axis=0)
    ref = jnp.maximum((x - mean) * jax.lax.rsqrt(var + 1e-5) * g + b, 0.0)
    err = float(jnp.max(jnp.abs(got - ref)))
    assert err < 1e-3, f"bn mismatch: {err}"


# ------------------------------------ main -----------------------------------

if __name__ == "__main__":
    BATCH, Z_DIM, IMG_C, HIDDEN = 2, 32, 1, 16   # small DCGAN(z_dim=32, 1, hidden=16)

    # kernel-level self-checks (Pallas vs pure-JAX f32 references)
    _selfcheck_convT()
    _selfcheck_bn()

    key = jax.random.PRNGKey(0)
    k_param, k_z = jax.random.split(key)
    params = init_dcgan_params(k_param, z_dim=Z_DIM,
                               image_channels=IMG_C, hidden_dim=HIDDEN)
    prep = prepare_weights(params)
    z = jax.random.normal(k_z, (BATCH, Z_DIM), jnp.float32)

    fwd = jax.jit(dcgan_forward)
    out = jax.block_until_ready(fwd(prep, z))

    assert out.shape == (BATCH, IMG_C, 64, 64), out.shape
    assert bool(jnp.all(jnp.isfinite(out)))
    assert bool(jnp.all((out >= 0.0) & (out <= 1.0)))   # sigmoid output range

    # end-to-end cross-check vs the pure-JAX f32 reference.  Larger weight
    # scale so the sigmoid output is not squashed around 0.5 (gives the check
    # discriminating power); bf16-GEMM error stays well below the tolerance.
    chk_params = init_dcgan_params(jax.random.PRNGKey(3), z_dim=Z_DIM,
                                   image_channels=IMG_C, hidden_dim=HIDDEN,
                                   w_scale=0.3)
    z_chk = jax.random.normal(jax.random.PRNGKey(4), (BATCH, Z_DIM), jnp.float32)
    got = jax.block_until_ready(fwd(prepare_weights(chk_params), z_chk))
    ref = _reference_forward(chk_params, z_chk)
    max_diff = float(jnp.max(jnp.abs(got - ref)))
    assert max_diff < 3e-2, f"forward mismatch vs reference: {max_diff}"

    print("KERNEL_OK")
</pallas_src>

<mosaic_0001>
module attributes {stable_mosaic.version = 11 : i64} {
  func.func @_matmul_kernel(%arg0: i32, %arg1: i32, %arg2: memref<84x64xbf16, #tpu.memory_space<vmem>>, %arg3: memref<64x32xbf16, #tpu.memory_space<vmem>>, %arg4: memref<84x32xf32, #tpu.memory_space<vmem>>) attributes {dimension_semantics = [#tpu.dimension_semantics<parallel>, #tpu.dimension_semantics<parallel>], iteration_bounds = array<i64: 1, 1>, scalar_prefetch = 0 : i64, scratch_operands = 0 : i64, tpu.core_type = #tpu.core_type<tc>, window_params = [{transform_indices = @transform_0, window_bounds = array<i64: 84, 64>}, {transform_indices = @transform_1, window_bounds = array<i64: 64, 32>}, {transform_indices = @transform_2, window_bounds = array<i64: 84, 32>}]} {
    %c0 = arith.constant 0 : index
    %c0_0 = arith.constant 0 : index
    %0 = vector.load %arg2[%c0, %c0_0] : memref<84x64xbf16, #tpu.memory_space<vmem>>, vector<84x64xbf16>
    %c0_1 = arith.constant 0 : index
    %c0_2 = arith.constant 0 : index
    %1 = vector.load %arg3[%c0_1, %c0_2] : memref<64x32xbf16, #tpu.memory_space<vmem>>, vector<64x32xbf16>
    %cst = arith.constant dense<0.000000e+00> : vector<84x32xf32>
    %2 = tpu.matmul %0, %1, %cst {dimension_numbers = #tpu.dot_dimension_numbers<[1], [0], [0], [1], [0, 0, 1, 1], [], []>} : vector<84x64xbf16>, vector<64x32xbf16>, vector<84x32xf32> -> vector<84x32xf32>
    %c0_3 = arith.constant 0 : index
    %c0_4 = arith.constant 0 : index
    %3 = vector.load %arg4[%c0_3, %c0_4] : memref<84x32xf32, #tpu.memory_space<vmem>>, vector<84x32xf32>
    tpu.vector_store %arg4[%c0_3, %c0_4], %2 {strides = array<i32>} : memref<84x32xf32, #tpu.memory_space<vmem>>, vector<84x32xf32>,
    return
  }
  func.func @transform_0(%arg0: i32, %arg1: i32) -> (i32, i32) {
    %c0_i32 = arith.constant 0 : i32
    %c0_i32_0 = arith.constant 0 : i32
    return %arg0, %c0_i32 : i32, i32
  }
  func.func @transform_1(%arg0: i32, %arg1: i32) -> (i32, i32) {
    %c0_i32 = arith.constant 0 : i32
    %c0_i32_0 = arith.constant 0 : i32
    return %c0_i32, %arg1 : i32, i32
  }
  func.func @transform_2(%arg0: i32, %arg1: i32) -> (i32, i32) {
    %c0_i32 = arith.constant 0 : i32
    return %arg0, %arg1 : i32, i32
  }
}

</mosaic_0001>

<llo_original>
// kernel: tpu_custom_call.1
$region0: #{tpu_custom_call.1}
  #allocation0 [shape = 'u32[]', space=smem, size = 0x4, offset = 0x4, fixed_abs, tag = 'smem constant byte address 0x4 - core index']
  #allocation1 [shape = 'u32[72,128]{1,0:T(1,128)}', space=vmem, size = 0x9000, scoped, tag = 'internal scratch']
  %s0 = inlined_call_operand.vmem [shape: bf16[84,64], index: 0, kind: input, shape index: {}]
  %s1 = inlined_call_operand.vmem [shape: bf16[64,32], index: 1, kind: input, shape index: {}]
  %s2 = inlined_call_operand.vmem [shape: f32[84,32], index: 2, kind: output, shape index: {}]
  %s3 = sld [smem:[#allocation0]]
  $region18: #{tpu_custom_call.1} parent=0
    _
  %s5 = ssub.s32 1, %s3
  %s6 = scalar_select 0, %s5, %s3
  // Predicated region
  $region2: #{tpu_custom_call.1} parent=0 // pred_check
    _
  $region3: #{tpu_custom_call.1} parent=0 // pred_check_branch
    %8 = sbr.rel (0) target = $region5
  $region4: #{tpu_custom_call.1} parent=0 // pred_region
    _
  $region5: #{tpu_custom_call.1} parent=0 // pred_fallthru
    _
  // Predicated region
  $region6: #{tpu_custom_call.1} parent=0 // pred_check
    _
  $region7: #{tpu_custom_call.1} parent=0 // pred_check_branch
    %10 = sbr.rel (0) target = $region9
  $region8: #{tpu_custom_call.1} parent=0 // pred_region
    _
  $region9: #{tpu_custom_call.1} parent=0 // pred_fallthru
    _
  %v12 = vld [vmem:[%s0] sm:$0xf]
  %v13 = vld [vmem:[%s0 + $0x4] sm:$0xf]
  %v14 = vld [vmem:[%s0 + $0x8] sm:$0xf]
  %v15 = vld [vmem:[%s0 + $0xc] sm:$0xf]
  %v16 = vld [vmem:[%s0 + $0x10] sm:$0xf]
  %v17 = vld [vmem:[%s0 + $0x14] sm:$0xf]
  %v18 = vld [vmem:[%s0 + $0x18] sm:$0xf]
  %v19 = vld [vmem:[%s0 + $0x1c] sm:$0xf]
  %v20 = vld [vmem:[%s0 + $0x20] sm:$0xf]
  %v21 = vld [vmem:[%s0 + $0x24] sm:$0xf]
  %v22 = vld [vmem:[%s0 + $0x28] sm:$0x3]
  %v23 = vld [vmem:[%s1] sm:$0xf]
  %v24 = vld [vmem:[%s1 + $0x4] sm:$0xf]
  %v25 = vld [vmem:[%s1 + $0x8] sm:$0xf]
  %v26 = vld [vmem:[%s1 + $0xc] sm:$0xf]
  %v27 = vld [vmem:[%s1 + $0x10] sm:$0xf]
  %v28 = vld [vmem:[%s1 + $0x14] sm:$0xf]
  %v29 = vld [vmem:[%s1 + $0x18] sm:$0xf]
  %v30 = vld [vmem:[%s1 + $0x1c] sm:$0xf]
  %v42 = vunpack.c.l.b16 %v12
  %v43 = vunpack.c.l.b16 %v13
  %v44 = vunpack.c.l.b16 %v14
  %v45 = vunpack.c.l.b16 %v15
  %v46 = vunpack.c.l.b16 %v16
  %v47 = vunpack.c.l.b16 %v17
  %v48 = vunpack.c.l.b16 %v18
  %v49 = vunpack.c.l.b16 %v19
  %v50 = vunpack.c.l.b16 %v20
  %v51 = vunpack.c.l.b16 %v21
  %v52 = vunpack.c.l.b16 %v22
  %v53 = vpack.c.b16 %v43, %v42
  %v54 = vpack.c.b16 %v45, %v44
  %v55 = vpack.c.b16 %v47, %v46
  %v56 = vpack.c.b16 %v49, %v48
  %v57 = vpack.c.b16 %v51, %v50
  %v58 = vpack.c.b16 %v52, %v52
  %v67 = vunpack.c.l.b16 %v23
  %v68 = vunpack.c.l.b16 %v24
  %v69 = vunpack.c.l.b16 %v25
  %v70 = vunpack.c.l.b16 %v26
  %v71 = vunpack.c.l.b16 %v27
  %v72 = vunpack.c.l.b16 %v28
  %v73 = vunpack.c.l.b16 %v29
  %v74 = vunpack.c.l.b16 %v30
  %v75 = vpack.c.b16 %v68, %v67
  %v76 = vpack.c.b16 %v70, %v69
  %v77 = vpack.c.b16 %v72, %v71
  %v78 = vpack.c.b16 %v74, %v73
  %vm83 = vcmask 523264
  %v85 = vsel %vm83, %v53, 0
  %v88 = vsel %vm83, %v54, 0
  %v91 = vsel %vm83, %v55, 0
  %v94 = vsel %vm83, %v56, 0
  %v97 = vsel %vm83, %v57, 0
  %v100 = vsel %vm83, %v58, 0
  %102 = vmatpush.bf16.msra.mxu0 0
  %103 = vmatpush.bf16.msra.mxu0 0
  %104 = vmatpush.bf16.msra.mxu0 0
  %105 = vmatpush.bf16.msra.mxu0 0
  %106 = vmatpush.bf16.msra.mxu0 %v78
  %107 = vmatpush.bf16.msra.mxu0 %v77
  %108 = vmatpush.bf16.msra.mxu0 %v76
  %109 = vmatpush.bf16.msra.mxu0 %v75
  %110 = vmatmul.bf16.gmra.mxu0 %v85
  %v111 = vpop.f32.mrf.mxu0
  %v112 = vadd.f32 0.0, %v111
  %v113 = vpop.f32.mrf.mxu0
  %v114 = vadd.f32 0.0, %v113
  %115 = vmatmul.bf16.gmra.mxu0 %v88
  %v116 = vpop.f32.mrf.mxu0
  %v117 = vadd.f32 0.0, %v116
  %v118 = vpop.f32.mrf.mxu0
  %v119 = vadd.f32 0.0, %v118
  %120 = vmatmul.bf16.gmra.mxu0 %v91
  %v121 = vpop.f32.mrf.mxu0
  %v122 = vadd.f32 0.0, %v121
  %v123 = vpop.f32.mrf.mxu0
  %v124 = vadd.f32 0.0, %v123
  %125 = vmatmul.bf16.gmra.mxu0 %v94
  %v126 = vpop.f32.mrf.mxu0
  %v127 = vadd.f32 0.0, %v126
  %v128 = vpop.f32.mrf.mxu0
  %v129 = vadd.f32 0.0, %v128
  %130 = vmatmul.bf16.gmra.mxu0 %v97
  %v131 = vpop.f32.mrf.mxu0
  %v132 = vadd.f32 0.0, %v131
  %v133 = vpop.f32.mrf.mxu0
  %v134 = vadd.f32 0.0, %v133
  %135 = vmatmul.bf16.gmra.mxu0 %v100
  %v136 = vpop.f32.mrf.mxu0
  %v137 = vadd.f32 0.0, %v136
  %v138 = vpop.f32.mrf.mxu0
  %139 = vdwg.mxu0
  %vm140 = vcmask 261120
  %141 = vst.msk [vmem:[%s2] sm:$0xff] %vm140, %v112
  %142 = vst.msk [vmem:[%s2 + $0x8] sm:$0xff] %vm140, %v114
  %143 = vst.msk [vmem:[%s2 + $0x10] sm:$0xff] %vm140, %v117
  %144 = vst.msk [vmem:[%s2 + $0x18] sm:$0xff] %vm140, %v119
  %145 = vst.msk [vmem:[%s2 + $0x20] sm:$0xff] %vm140, %v122
  %146 = vst.msk [vmem:[%s2 + $0x28] sm:$0xff] %vm140, %v124
  %147 = vst.msk [vmem:[%s2 + $0x30] sm:$0xff] %vm140, %v127
  %148 = vst.msk [vmem:[%s2 + $0x38] sm:$0xff] %vm140, %v129
  %149 = vst.msk [vmem:[%s2 + $0x40] sm:$0xff] %vm140, %v132
  %150 = vst.msk [vmem:[%s2 + $0x48] sm:$0xff] %vm140, %v134
  %vm151 = vcmask 257024
  %152 = vst.msk [vmem:[%s2 + $0x50] sm:$0xf] %vm151, %v137
  // Predicated region
  $region10: #{tpu_custom_call.1} parent=0 // pred_check
    _
  $region11: #{tpu_custom_call.1} parent=0 // pred_check_branch
    %154 = sbr.rel (0) target = $region13
  $region12: #{tpu_custom_call.1} parent=0 // pred_region
    _
  $region13: #{tpu_custom_call.1} parent=0 // pred_fallthru
    _
  // Predicated region
  $region14: #{tpu_custom_call.1} parent=0 // pred_check
    _
  $region15: #{tpu_custom_call.1} parent=0 // pred_check_branch
    %156 = sbr.rel (0) target = $region17
  $region16: #{tpu_custom_call.1} parent=0 // pred_region
    _
  $region17: #{tpu_custom_call.1} parent=0 // pred_fallthru
    _

</llo_original>
